<compile_context>
chip_gen: v5e
topology: v5e:2x2
jax: 0.10.0
libtpu: 0.0.40
codegen_flags: <defaults>
</compile_context>

<pallas_src>
import functools

import jax
import jax.numpy as jnp
from jax import lax
from jax.experimental import pallas as pl
from jax.experimental.pallas import tpu as pltpu

_MIB = 1024 * 1024


def _round_up(v, m):
    return (v + m - 1) // m * m


# ---------------------------------------------------------------------------
# Hardware-derived budgets
# ---------------------------------------------------------------------------
def _hw_budgets():
    """Returns (num_tensorcores, tile working-set budget, scoped-vmem cap)."""
    try:
        cap = int(pltpu.get_tpu_info().vmem_capacity_bytes)
    except Exception:
        cap = 64 * _MIB  # conservative default (v7x-sized VMEM)
    if cap <= 80 * _MIB:
        # v7x-class: ~64 MiB VMEM per TensorCore, 2 TensorCores share the grid.
        num_tc = 2
        tile_budget = 40 * _MIB
        vmem_cap = max(cap - 8 * _MIB, 32 * _MIB)
    else:
        # v5e / v6e-class: 128 MiB VMEM, single TensorCore.
        num_tc = 1
        tile_budget = 96 * _MIB
        vmem_cap = min(cap - 18 * _MIB, 110 * _MIB)
    return num_tc, tile_budget, vmem_cap


# ---------------------------------------------------------------------------
# VMEM working-set estimators (include f32 temporaries + lane padding)
# ---------------------------------------------------------------------------
def _fused_vmem_bytes(B, tc, HW, itemsize):
    tc_p = _round_up(tc, 8)
    hw_p = _round_up(HW, 128)
    big = B * tc_p * hw_p
    io = 2 * 2 * big * itemsize                    # x + out blocks, double-buffered
    f32_tmp = (1 if itemsize >= 4 else 2) * big * 4  # upcast / epilogue temporaries
    noise = 2 * 2 * B * tc_p * 128 * 4             # two (B,tc,1) blocks, lane-padded, 2 bufs
    small = 8 * B * tc_p * 128 * 4                 # per-(B,C) f32 stat temporaries
    return io + f32_tmp + noise + small


def _apply_vmem_bytes(B, tc, ts, itemsize):
    tc_p = _round_up(tc, 8)
    ts_p = _round_up(ts, 128)
    big = B * tc_p * ts_p
    io = 2 * 2 * big * itemsize                    # x + out blocks, double-buffered
    f32_tmp = (1 if itemsize >= 4 else 2) * big * 4
    small = 3 * 2 * B * tc_p * 128 * 4             # mean/scale/beta blocks, lane-padded
    return io + f32_tmp + small


# ---------------------------------------------------------------------------
# Tile pickers
# ---------------------------------------------------------------------------
def _balanced_pick(fitting, C):
    """Among fitting channel tiles, prefer even tile counts with balanced
    per-core work (ceil(n/2)*tc), then larger tiles (fewer grid steps)."""
    best = None
    for t in fitting:
        n = -(-C // t)
        key = (0 if n % 2 == 0 else 1, -(-n // 2) * t, -t)
        if best is None or key < best[0]:
            best = (key, t)
    return best[1]


def _pick_fused_channel_tile(B, C, HW, itemsize, tile_budget, num_tc):
    cands = sorted({C} | set(range(8, C, 8)), reverse=True)
    fitting = [t for t in cands if _fused_vmem_bytes(B, t, HW, itemsize) <= tile_budget]
    if not fitting:
        return None  # even the minimal fused tile overflows -> two-pass fallback
    if num_tc <= 1 or C <= 8:
        return fitting[0]          # single TC: largest block, no artificial split
    return _balanced_pick(fitting, C)


def _pick_two_pass_tiles(B, C, HW, itemsize, tile_budget, num_tc):
    ts_cands = sorted({HW} | set(range(128, HW, 128)), reverse=True)
    tc_min = C if C <= 8 else 8
    ts = None
    for t in ts_cands:
        if _apply_vmem_bytes(B, tc_min, t, itemsize) <= tile_budget:
            ts = t
            break
    if ts is None:
        ts = min(128, HW)
    tc_cands = sorted({C} | set(range(8, C, 8)), reverse=True)
    fitting = [t for t in tc_cands if _apply_vmem_bytes(B, t, ts, itemsize) <= tile_budget]
    if not fitting:
        fitting = [tc_min]
    if num_tc <= 1 or C <= 8:
        return fitting[0], ts
    return _balanced_pick(fitting, C), ts


# ---------------------------------------------------------------------------
# Kernels
# ---------------------------------------------------------------------------
def _dsu_fused_kernel(x_ref, n1_ref, n2_ref, o_ref, *, eps, factor, hw, b):
    # Blocks: x/o (B, Ct, HW), n1/n2 (B, Ct, 1).  All stats in f32.
    x = x_ref[...].astype(jnp.float32)

    # Per-(B,C) spatial statistics (lane reduction over HW); torch .var() is
    # UNBIASED -> /(HW - 1).
    mean = jnp.mean(x, axis=-1, keepdims=True)                            # (B,Ct,1)
    var = jnp.sum(jnp.square(x - mean), axis=-1, keepdims=True) / (hw - 1.0)
    std = jnp.sqrt(var + eps)
    inv_std = lax.rsqrt(var + eps)          # EUP rsqrt instead of a f32 divide

    # sqrtvar over the batch dimension (unbiased, divisor B-1).
    mu_b = jnp.mean(mean, axis=0, keepdims=True)
    sqrtvar_mu = jnp.sqrt(
        jnp.sum(jnp.square(mean - mu_b), axis=0, keepdims=True) / (b - 1.0) + eps)
    std_b = jnp.mean(std, axis=0, keepdims=True)
    sqrtvar_std = jnp.sqrt(
        jnp.sum(jnp.square(std - std_b), axis=0, keepdims=True) / (b - 1.0) + eps)

    # reparameterize: mu + noise * factor * sqrtvar.
    beta = mean + n1_ref[...].astype(jnp.float32) * (factor * sqrtvar_mu)
    gamma = std + n2_ref[...].astype(jnp.float32) * (factor * sqrtvar_std)
    scale = gamma * inv_std                                               # (B,Ct,1)

    # Epilogue recomputes (x - mean) inline: no full-block diff temporary is
    # kept live across the batch-stat section (VPU slack absorbs the re-sub).
    o_ref[...] = ((x - mean) * scale + beta).astype(o_ref.dtype)


def _dsu_stats_kernel(x_ref, sum_ref, sq_ref, *, hw, ts):
    # Pass 1 of the fallback: accumulate per-(B, C) sum / sum-of-squares.
    hi = pl.program_id(1)

    @pl.when(hi == 0)
    def _():
        sum_ref[...] = jnp.zeros_like(sum_ref)
        sq_ref[...] = jnp.zeros_like(sq_ref)

    x = x_ref[...].astype(jnp.float32)
    if hw % ts != 0:  # mask padded spatial elements of the last HW tile
        col = lax.broadcasted_iota(jnp.int32, x.shape, 2) + hi * ts
        x = jnp.where(col < hw, x, 0.0)
    sum_ref[...] += jnp.sum(x, axis=-1, keepdims=True)
    sq_ref[...] += jnp.sum(x * x, axis=-1, keepdims=True)


def _dsu_apply_kernel(x_ref, mean_ref, scale_ref, beta_ref, o_ref):
    # Pass 2 of the fallback: elementwise (x - mean) * scale + beta.
    x = x_ref[...].astype(jnp.float32)
    o_ref[...] = ((x - mean_ref[...]) * scale_ref[...] + beta_ref[...]).astype(o_ref.dtype)


# ---------------------------------------------------------------------------
# pallas_call wrappers
# ---------------------------------------------------------------------------
def _dsu_fused(x_flat, n1, n2, *, eps, factor, tc, vmem_cap):
    B, C, HW = x_flat.shape
    itemsize = jnp.dtype(x_flat.dtype).itemsize
    grid = (pl.cdiv(C, tc),)
    est = _fused_vmem_bytes(B, tc, HW, itemsize)
    vmem_limit = int(min(vmem_cap, max(32 * _MIB, est + est // 4)))

    kernel = functools.partial(_dsu_fused_kernel, eps=eps, factor=factor,
                               hw=float(HW), b=float(B))
    cost = pl.CostEstimate(
        flops=int(10 * B * C * HW),
        transcendentals=int(4 * B * C),
        bytes_accessed=int(2 * B * C * HW * itemsize),
    )
    return pl.pallas_call(
        kernel,
        out_shape=jax.ShapeDtypeStruct((B, C, HW), x_flat.dtype),
        grid_spec=pltpu.PrefetchScalarGridSpec(
            num_scalar_prefetch=0,
            grid=grid,
            in_specs=[
                pl.BlockSpec((B, tc, HW), lambda i: (0, i, 0)),
                pl.BlockSpec((B, tc, 1), lambda i: (0, i, 0)),
                pl.BlockSpec((B, tc, 1), lambda i: (0, i, 0)),
            ],
            out_specs=pl.BlockSpec((B, tc, HW), lambda i: (0, i, 0)),
        ),
        compiler_params=pltpu.CompilerParams(
            dimension_semantics=("parallel",),
            vmem_limit_bytes=vmem_limit,
        ),
        cost_estimate=cost,
    )(x_flat, n1, n2)


def _dsu_two_pass(x_flat, n1, n2, *, eps, factor, tc, ts, vmem_cap):
    """Fallback for shapes whose minimal fused tile does not fit in VMEM:
    pass 1 accumulates per-(B,C) sum/sumsq, tiny stats run in plain XLA,
    pass 2 applies the elementwise normalization (costs one extra x read)."""
    B, C, HW = x_flat.shape
    itemsize = jnp.dtype(x_flat.dtype).itemsize
    nc = pl.cdiv(C, tc)
    nhw = pl.cdiv(HW, ts)
    est = _apply_vmem_bytes(B, tc, ts, itemsize)
    vmem_limit = int(min(vmem_cap, max(32 * _MIB, est + est // 4)))
    # TODO(synk): if even the minimal (8, 128) tile exceeds physical VMEM there
    #             is no smaller legal tile and compilation will fail.

    # ---- pass 1: per-(B, C) sum / sum-of-squares over HW ----
    stats_kernel = functools.partial(_dsu_stats_kernel, hw=HW, ts=ts)
    s, sq = pl.pallas_call(
        stats_kernel,
        out_shape=(jax.ShapeDtypeStruct((B, C, 1), jnp.float32),
                   jax.ShapeDtypeStruct((B, C, 1), jnp.float32)),
        grid_spec=pltpu.PrefetchScalarGridSpec(
            num_scalar_prefetch=0,
            grid=(nc, nhw),
            in_specs=[pl.BlockSpec((B, tc, ts), lambda ci, hi: (0, ci, hi))],
            out_specs=[pl.BlockSpec((B, tc, 1), lambda ci, hi: (0, ci, 0)),
                       pl.BlockSpec((B, tc, 1), lambda ci, hi: (0, ci, 0))],
        ),
        compiler_params=pltpu.CompilerParams(
            dimension_semantics=("parallel", "arbitrary"),
            vmem_limit_bytes=vmem_limit,
        ),
        cost_estimate=pl.CostEstimate(
            flops=int(3 * B * C * HW), transcendentals=0,
            bytes_accessed=int(B * C * HW * itemsize)),
    )(x_flat)

    # ---- tiny per-(B, C) statistics in plain XLA ----
    hw_f = jnp.float32(HW)
    mean = s / hw_f
    var = jnp.maximum(sq - s * mean, 0.0) / (hw_f - 1.0)   # unbiased
    std = jnp.sqrt(var + eps)
    inv_std = lax.rsqrt(var + eps)
    mu_b = jnp.mean(mean, axis=0, keepdims=True)
    sv_mu = jnp.sqrt(jnp.sum(jnp.square(mean - mu_b), axis=0, keepdims=True)
                     / (B - 1.0) + eps)
    st_b = jnp.mean(std, axis=0, keepdims=True)
    sv_st = jnp.sqrt(jnp.sum(jnp.square(std - st_b), axis=0, keepdims=True)
                     / (B - 1.0) + eps)
    beta = mean + n1.astype(jnp.float32) * (factor * sv_mu)
    gamma = std + n2.astype(jnp.float32) * (factor * sv_st)
    scale = gamma * inv_std

    # ---- pass 2: elementwise apply ----
    return pl.pallas_call(
        _dsu_apply_kernel,
        out_shape=jax.ShapeDtypeStruct((B, C, HW), x_flat.dtype),
        grid_spec=pltpu.PrefetchScalarGridSpec(
            num_scalar_prefetch=0,
            grid=(nc, nhw),
            in_specs=[
                pl.BlockSpec((B, tc, ts), lambda ci, hi: (0, ci, hi)),
                pl.BlockSpec((B, tc, 1), lambda ci, hi: (0, ci, 0)),
                pl.BlockSpec((B, tc, 1), lambda ci, hi: (0, ci, 0)),
                pl.BlockSpec((B, tc, 1), lambda ci, hi: (0, ci, 0)),
            ],
            out_specs=pl.BlockSpec((B, tc, ts), lambda ci, hi: (0, ci, hi)),
        ),
        compiler_params=pltpu.CompilerParams(
            dimension_semantics=("parallel", "parallel"),
            vmem_limit_bytes=vmem_limit,
        ),
        cost_estimate=pl.CostEstimate(
            flops=int(3 * B * C * HW), transcendentals=0,
            bytes_accessed=int(2 * B * C * HW * itemsize)),
    )(x_flat, mean, scale, beta)


# ---------------------------------------------------------------------------
# Public entry point
# ---------------------------------------------------------------------------
def distribution_uncertainty(x, noise_mu, noise_std, *, eps=1e-6, factor=1.0,
                             channel_tile=None, spatial_tile=None,
                             force_two_pass=False):
    """x: (B, C, H, W);  noise_mu / noise_std: (B, C) float ~ N(0,1).

    Note: B == 1 (or H*W == 1) divides by (B-1) / (HW-1) = 0 -> NaN/Inf,
    matching torch's unbiased var behavior."""
    B, C, H, W = x.shape
    HW = H * W
    itemsize = jnp.dtype(x.dtype).itemsize

    x_flat = x.reshape(B, C, HW)
    n1 = noise_mu.reshape(B, C, 1)
    n2 = noise_std.reshape(B, C, 1)

    num_tc, tile_budget, vmem_cap = _hw_budgets()

    use_two_pass = force_two_pass
    tc = channel_tile
    if not use_two_pass:
        if tc is None:
            tc = _pick_fused_channel_tile(B, C, HW, itemsize, tile_budget, num_tc)
        if tc is None:
            use_two_pass = True   # minimal fused tile does not fit on-chip

    if use_two_pass:
        tc2, ts = _pick_two_pass_tiles(B, C, HW, itemsize, tile_budget, num_tc)
        if channel_tile is not None:
            tc2 = channel_tile
        if spatial_tile is not None:
            ts = spatial_tile
        out_flat = _dsu_two_pass(x_flat, n1, n2, eps=eps, factor=factor,
                                 tc=tc2, ts=ts, vmem_cap=vmem_cap)
    else:
        out_flat = _dsu_fused(x_flat, n1, n2, eps=eps, factor=factor,
                              tc=tc, vmem_cap=vmem_cap)
    return out_flat.reshape(B, C, H, W)


# ---------------------------------------------------------------------------
# Pure-JAX reference (mirrors the PyTorch module's training branch)
# ---------------------------------------------------------------------------
def _reference(x, noise_mu, noise_std, eps=1e-6, factor=1.0):
    mean = jnp.mean(x, axis=(2, 3))
    var = jnp.var(x, axis=(2, 3), ddof=1)
    std = jnp.sqrt(var + eps)
    sqrtvar_mu = jnp.sqrt(jnp.var(mean, axis=0, keepdims=True, ddof=1) + eps)
    sqrtvar_std = jnp.sqrt(jnp.var(std, axis=0, keepdims=True, ddof=1) + eps)
    beta = mean + noise_mu * factor * sqrtvar_mu
    gamma = std + noise_std * factor * sqrtvar_std
    xn = (x - mean[:, :, None, None]) / std[:, :, None, None]
    return xn * gamma[:, :, None, None] + beta[:, :, None, None]


if __name__ == "__main__":
    key = jax.random.PRNGKey(0)
    kx, k1, k2, kx2, k3, k4 = jax.random.split(key, 6)

    # --- shape 1: fused single-pass path ---
    B, C, H, W = 2, 4, 16, 16
    x = jax.random.normal(kx, (B, C, H, W), dtype=jnp.float32) * 2.0 + 0.5
    # Deterministic stand-ins for torch.randn_like(std) in _reparameterize:
    noise_mu = jax.random.normal(k1, (B, C), dtype=jnp.float32)
    noise_std = jax.random.normal(k2, (B, C), dtype=jnp.float32)

    out = distribution_uncertainty(x, noise_mu, noise_std, eps=1e-6, factor=1.0)
    out = jax.block_until_ready(out)
    ref = _reference(x, noise_mu, noise_std)
    assert jnp.allclose(out, ref, atol=1e-4, rtol=1e-4), "fused mismatch vs reference"

    # --- shape 2: ragged C / HW -> multi-tile fused + forced two-pass fallback ---
    B2, C2, H2, W2 = 4, 12, 10, 14            # HW = 140 (not /128), C not /8
    x2 = jax.random.normal(kx2, (B2, C2, H2, W2), dtype=jnp.float32) * 1.5 - 0.3
    nmu2 = jax.random.normal(k3, (B2, C2), dtype=jnp.float32)
    nst2 = jax.random.normal(k4, (B2, C2), dtype=jnp.float32)
    ref2 = _reference(x2, nmu2, nst2)

    out2a = distribution_uncertainty(x2, nmu2, nst2, channel_tile=8)  # 2 channel tiles
    out2a = jax.block_until_ready(out2a)
    assert jnp.allclose(out2a, ref2, atol=5e-4, rtol=5e-4), "fused tiled mismatch"

    out2b = distribution_uncertainty(x2, nmu2, nst2, force_two_pass=True,
                                     channel_tile=8, spatial_tile=128)
    out2b = jax.block_until_ready(out2b)
    assert jnp.allclose(out2b, ref2, atol=5e-4, rtol=5e-4), "two-pass mismatch"

    print("KERNEL_OK")
</pallas_src>

<mosaic_0001>
module attributes {stable_mosaic.version = 11 : i64} {
  func.func @_dsu_fused_kernel(%arg0: i32, %arg1: memref<2x4x256xf32, #tpu.memory_space<vmem>>, %arg2: memref<2x4x1xf32, #tpu.memory_space<vmem>>, %arg3: memref<2x4x1xf32, #tpu.memory_space<vmem>>, %arg4: memref<2x4x256xf32, #tpu.memory_space<vmem>>) attributes {dimension_semantics = [#tpu.dimension_semantics<parallel>], iteration_bounds = array<i64: 1>, scalar_prefetch = 0 : i64, scratch_operands = 0 : i64, tpu.core_type = #tpu.core_type<tc>, window_params = [{transform_indices = @transform_0, window_bounds = array<i64: 2, 4, 256>}, {transform_indices = @transform_1, window_bounds = array<i64: 2, 4, 1>}, {transform_indices = @transform_2, window_bounds = array<i64: 2, 4, 1>}, {transform_indices = @transform_3, window_bounds = array<i64: 2, 4, 256>}]} {
    %c0 = arith.constant 0 : index
    %c0_0 = arith.constant 0 : index
    %c0_1 = arith.constant 0 : index
    %0 = vector.load %arg1[%c0, %c0_0, %c0_1] : memref<2x4x256xf32, #tpu.memory_space<vmem>>, vector<2x4x256xf32>
    %cst = arith.constant dense<0.000000e+00> : vector<2x4xf32>
    %1 = vector.multi_reduction <add>, %0, %cst [2] : vector<2x4x256xf32> to vector<2x4xf32>
    %2 = vector.shape_cast %1 : vector<2x4xf32> to vector<2x4x1xf32>
    %cst_2 = arith.constant 2.560000e+02 : f32
    %3 = vector.broadcast %cst_2 : f32 to vector<2x4x1xf32>
    %4 = arith.divf %2, %3 : vector<2x4x1xf32>
    %5 = vector.broadcast %4 : vector<2x4x1xf32> to vector<2x4x256xf32>
    %6 = arith.subf %0, %5 : vector<2x4x256xf32>
    %7 = arith.mulf %6, %6 : vector<2x4x256xf32>
    %cst_3 = arith.constant dense<0.000000e+00> : vector<2x4xf32>
    %8 = vector.multi_reduction <add>, %7, %cst_3 [2] : vector<2x4x256xf32> to vector<2x4xf32>
    %9 = vector.shape_cast %8 : vector<2x4xf32> to vector<2x4x1xf32>
    %cst_4 = arith.constant 2.550000e+02 : f32
    %10 = vector.broadcast %cst_4 : f32 to vector<2x4x1xf32>
    %11 = arith.divf %9, %10 : vector<2x4x1xf32>
    %cst_5 = arith.constant 9.99999997E-7 : f32
    %12 = vector.broadcast %cst_5 : f32 to vector<2x4x1xf32>
    %13 = arith.addf %11, %12 : vector<2x4x1xf32>
    %14 = math.sqrt %13 : vector<2x4x1xf32>
    %cst_6 = arith.constant 9.99999997E-7 : f32
    %15 = vector.broadcast %cst_6 : f32 to vector<2x4x1xf32>
    %16 = arith.addf %11, %15 : vector<2x4x1xf32>
    %17 = math.rsqrt %16 : vector<2x4x1xf32>
    %cst_7 = arith.constant dense<0.000000e+00> : vector<4x1xf32>
    %18 = vector.multi_reduction <add>, %4, %cst_7 [0] : vector<2x4x1xf32> to vector<4x1xf32>
    %19 = vector.shape_cast %18 : vector<4x1xf32> to vector<1x4x1xf32>
    %cst_8 = arith.constant 2.000000e+00 : f32
    %20 = vector.broadcast %cst_8 : f32 to vector<1x4x1xf32>
    %21 = arith.divf %19, %20 : vector<1x4x1xf32>
    %22 = vector.broadcast %21 : vector<1x4x1xf32> to vector<2x4x1xf32>
    %23 = arith.subf %4, %22 : vector<2x4x1xf32>
    %24 = arith.mulf %23, %23 : vector<2x4x1xf32>
    %cst_9 = arith.constant dense<0.000000e+00> : vector<4x1xf32>
    %25 = vector.multi_reduction <add>, %24, %cst_9 [0] : vector<2x4x1xf32> to vector<4x1xf32>
    %26 = vector.shape_cast %25 : vector<4x1xf32> to vector<1x4x1xf32>
    %cst_10 = arith.constant 1.000000e+00 : f32
    %27 = vector.broadcast %cst_10 : f32 to vector<1x4x1xf32>
    %28 = arith.divf %26, %27 : vector<1x4x1xf32>
    %cst_11 = arith.constant 9.99999997E-7 : f32
    %29 = vector.broadcast %cst_11 : f32 to vector<1x4x1xf32>
    %30 = arith.addf %28, %29 : vector<1x4x1xf32>
    %31 = math.sqrt %30 : vector<1x4x1xf32>
    %cst_12 = arith.constant dense<0.000000e+00> : vector<4x1xf32>
    %32 = vector.multi_reduction <add>, %14, %cst_12 [0] : vector<2x4x1xf32> to vector<4x1xf32>
    %33 = vector.shape_cast %32 : vector<4x1xf32> to vector<1x4x1xf32>
    %cst_13 = arith.constant 2.000000e+00 : f32
    %34 = vector.broadcast %cst_13 : f32 to vector<1x4x1xf32>
    %35 = arith.divf %33, %34 : vector<1x4x1xf32>
    %36 = vector.broadcast %35 : vector<1x4x1xf32> to vector<2x4x1xf32>
    %37 = arith.subf %14, %36 : vector<2x4x1xf32>
    %38 = arith.mulf %37, %37 : vector<2x4x1xf32>
    %cst_14 = arith.constant dense<0.000000e+00> : vector<4x1xf32>
    %39 = vector.multi_reduction <add>, %38, %cst_14 [0] : vector<2x4x1xf32> to vector<4x1xf32>
    %40 = vector.shape_cast %39 : vector<4x1xf32> to vector<1x4x1xf32>
    %cst_15 = arith.constant 1.000000e+00 : f32
    %41 = vector.broadcast %cst_15 : f32 to vector<1x4x1xf32>
    %42 = arith.divf %40, %41 : vector<1x4x1xf32>
    %cst_16 = arith.constant 9.99999997E-7 : f32
    %43 = vector.broadcast %cst_16 : f32 to vector<1x4x1xf32>
    %44 = arith.addf %42, %43 : vector<1x4x1xf32>
    %45 = math.sqrt %44 : vector<1x4x1xf32>
    %c0_17 = arith.constant 0 : index
    %c0_18 = arith.constant 0 : index
    %c0_19 = arith.constant 0 : index
    %46 = vector.load %arg2[%c0_17, %c0_18, %c0_19] : memref<2x4x1xf32, #tpu.memory_space<vmem>>, vector<2x4x1xf32>
    %cst_20 = arith.constant 1.000000e+00 : f32
    %47 = vector.broadcast %cst_20 : f32 to vector<1x4x1xf32>
    %48 = arith.mulf %47, %31 : vector<1x4x1xf32>
    %49 = vector.broadcast %48 : vector<1x4x1xf32> to vector<2x4x1xf32>
    %50 = arith.mulf %46, %49 : vector<2x4x1xf32>
    %51 = arith.addf %4, %50 : vector<2x4x1xf32>
    %c0_21 = arith.constant 0 : index
    %c0_22 = arith.constant 0 : index
    %c0_23 = arith.constant 0 : index
    %52 = vector.load %arg3[%c0_21, %c0_22, %c0_23] : memref<2x4x1xf32, #tpu.memory_space<vmem>>, vector<2x4x1xf32>
    %cst_24 = arith.constant 1.000000e+00 : f32
    %53 = vector.broadcast %cst_24 : f32 to vector<1x4x1xf32>
    %54 = arith.mulf %53, %45 : vector<1x4x1xf32>
    %55 = vector.broadcast %54 : vector<1x4x1xf32> to vector<2x4x1xf32>
    %56 = arith.mulf %52, %55 : vector<2x4x1xf32>
    %57 = arith.addf %14, %56 : vector<2x4x1xf32>
    %58 = arith.mulf %57, %17 : vector<2x4x1xf32>
    %59 = vector.broadcast %4 : vector<2x4x1xf32> to vector<2x4x256xf32>
    %60 = arith.subf %0, %59 : vector<2x4x256xf32>
    %61 = vector.broadcast %58 : vector<2x4x1xf32> to vector<2x4x256xf32>
    %62 = arith.mulf %60, %61 : vector<2x4x256xf32>
    %63 = vector.broadcast %51 : vector<2x4x1xf32> to vector<2x4x256xf32>
    %64 = arith.addf %62, %63 : vector<2x4x256xf32>
    %c0_25 = arith.constant 0 : index
    %c0_26 = arith.constant 0 : index
    %c0_27 = arith.constant 0 : index
    %65 = vector.load %arg4[%c0_25, %c0_26, %c0_27] : memref<2x4x256xf32, #tpu.memory_space<vmem>>, vector<2x4x256xf32>
    tpu.vector_store %arg4[%c0_25, %c0_26, %c0_27], %64 {strides = array<i32>} : memref<2x4x256xf32, #tpu.memory_space<vmem>>, vector<2x4x256xf32>,
    return
  }
  func.func @transform_0(%arg0: i32) -> (i32, i32, i32) {
    %c0_i32 = arith.constant 0 : i32
    %c0_i32_0 = arith.constant 0 : i32
    %c0_i32_1 = arith.constant 0 : i32
    return %c0_i32, %arg0, %c0_i32_0 : i32, i32, i32
  }
  func.func @transform_1(%arg0: i32) -> (i32, i32, i32) {
    %c0_i32 = arith.constant 0 : i32
    %c0_i32_0 = arith.constant 0 : i32
    %c0_i32_1 = arith.constant 0 : i32
    return %c0_i32, %arg0, %c0_i32_0 : i32, i32, i32
  }
  func.func @transform_2(%arg0: i32) -> (i32, i32, i32) {
    %c0_i32 = arith.constant 0 : i32
    %c0_i32_0 = arith.constant 0 : i32
    %c0_i32_1 = arith.constant 0 : i32
    return %c0_i32, %arg0, %c0_i32_0 : i32, i32, i32
  }
  func.func @transform_3(%arg0: i32) -> (i32, i32, i32) {
    %c0_i32 = arith.constant 0 : i32
    %c0_i32_0 = arith.constant 0 : i32
    %c0_i32_1 = arith.constant 0 : i32
    return %c0_i32, %arg0, %c0_i32_0 : i32, i32, i32
  }
}

</mosaic_0001>

<llo_original>
// kernel: tpu_custom_call.1
$region0: #{tpu_custom_call.1}
  #allocation0 [shape = 'u32[]', space=smem, size = 0x4, offset = 0x4, fixed_abs, tag = 'smem constant byte address 0x4 - core index']
  #allocation1 [shape = 'u32[72,128]{1,0:T(1,128)}', space=vmem, size = 0x9000, scoped, tag = 'internal scratch']
  %s0 = inlined_call_operand.vmem [shape: f32[2,4,256], index: 0, kind: input, shape index: {}]
  %s1 = inlined_call_operand.vmem [shape: f32[2,4,1], index: 1, kind: input, shape index: {}]
  %s2 = inlined_call_operand.vmem [shape: f32[2,4,1], index: 2, kind: input, shape index: {}]
  %s3 = inlined_call_operand.hbm [shape: f32[2,4,256], index: 3, kind: output, shape index: {}]
  %s4 = sld [smem:[#allocation0]]
  $region22: #{tpu_custom_call.1} parent=0
    _
  %s6 = ssub.s32 1, %s4
  %s7 = scalar_select 0, %s6, %s4
  $region1: #{tpu_custom_call.1} parent=0
    #allocation2 [shape = 'u8[8192]{0}', space=vmem, size = 0x2000, scoped, tag = 'output window, operand 0, single buffered']
    #allocation3 [shape = 's32[1]{0}', space=sflag, size = 0x4, scoped, tag = 'scoped memory for tpu_custom_call.1']
    %8 = vsyncpa [#allocation3], 0
    // Predicated region
    $region2: #{tpu_custom_call.1} parent=1 // pred_check
      _
    $region3: #{tpu_custom_call.1} parent=1 // pred_check_branch
      %10 = sbr.rel (0) target = $region5
    $region4: #{tpu_custom_call.1} parent=1 // pred_region
      _
    $region5: #{tpu_custom_call.1} parent=1 // pred_fallthru
      _
    // Predicated region
    $region6: #{tpu_custom_call.1} parent=1 // pred_check
      _
    $region7: #{tpu_custom_call.1} parent=1 // pred_check_branch
      %12 = sbr.rel (0) target = $region9
    $region8: #{tpu_custom_call.1} parent=1 // pred_region
      _
    $region9: #{tpu_custom_call.1} parent=1 // pred_fallthru
      _
    // Predicated region
    $region10: #{tpu_custom_call.1} parent=1 // pred_check
      _
    $region11: #{tpu_custom_call.1} parent=1 // pred_check_branch
      %14 = sbr.rel (0) target = $region13
    $region12: #{tpu_custom_call.1} parent=1 // pred_region
      _
    $region13: #{tpu_custom_call.1} parent=1 // pred_fallthru
      _
    %v15 = vld [vmem:[%s0] sm:$0xff]
    %v16 = vld [vmem:[%s0 + $0x8] sm:$0xff]
    %19 = vst [vmem:[#allocation1] ss:$2 sm:$0xff] %v15
    %v20 = vld.sshfl [vmem:[#allocation1] sm:$0xff pattern:$0x75316420]
    %v21 = vld.sshfl [vmem:[#allocation1 + $0x8] sm:$0xff pattern:$0x75316420]
    %s22 = scalar_lea.vmem [#allocation1], 16
    %23 = vst [vmem:[%s22] ss:$2 sm:$0xff] %v16
    %v24 = vld.sshfl [vmem:[#allocation1 + $0x10] sm:$0xff pattern:$0x75316420]
    %v25 = vld.sshfl [vmem:[#allocation1 + $0x18] sm:$0xff pattern:$0x75316420]
    %vm30 = vcmask 1043456
    %v31 = vsel %vm30, %v20, 0.0
    %v32 = vsel %vm30, %v21, 0.0
    %v33 = vadd.f32 %v31, %v32
    %34 = vadd.xlane.f32.xlu0 %v33
    %v35 = vpop.xlane.xlu0 %34
    %v36 = vsel %vm30, %v24, 0.0
    %v37 = vsel %vm30, %v25, 0.0
    %v38 = vadd.f32 %v36, %v37
    %39 = vadd.xlane.f32.xlu0 %v38
    %v40 = vpop.xlane.xlu0 %39
    %v41 = vrcp.pop 256.0
    %v42 = vmul.f32 256.0, %v41
    %v43 = vsub.f32 1.0, %v42
    %v44 = vmul.f32 %v41, %v43
    %v45 = vadd.f32 %v41, %v44
    %vm46 = vweird.f32 %v41
    %v47 = vsel %vm46, %v41, %v45
    %v48 = vmul.f32 %v35, %v47
    %v49 = vmul.f32 %v40, %v47
    %v53 = vunpack.c.l.s4 839922192
    %v54 = vunpack.c.0.s8 %v53
    %v55 = vperm.slane %v48, %v54
    %v57 = vunpack.c.l.s4 839922192
    %v58 = vunpack.c.0.s8 %v57
    %v59 = vperm.slane %v49, %v58
    %v62 = vsub.f32 %v15, %v55
    %v63 = vsub.f32 %v16, %v59
    %v64 = vmul.f32 %v62, %v62
    %v65 = vmul.f32 %v63, %v63
    %68 = vst [vmem:[#allocation1] ss:$2 sm:$0xff] %v64
    %v69 = vld.sshfl [vmem:[#allocation1] sm:$0xff pattern:$0x75316420]
    %v70 = vld.sshfl [vmem:[#allocation1 + $0x8] sm:$0xff pattern:$0x75316420]
    %s71 = scalar_lea.vmem [#allocation1], 16
    %72 = vst [vmem:[%s71] ss:$2 sm:$0xff] %v65
    %v73 = vld.sshfl [vmem:[#allocation1 + $0x10] sm:$0xff pattern:$0x75316420]
    %v74 = vld.sshfl [vmem:[#allocation1 + $0x18] sm:$0xff pattern:$0x75316420]
    %v79 = vsel %vm30, %v69, 0.0
    %v80 = vsel %vm30, %v70, 0.0
    %v81 = vadd.f32 %v79, %v80
    %82 = vadd.xlane.f32.xlu0 %v81
    %v83 = vpop.xlane.xlu0 %82
    %v84 = vsel %vm30, %v73, 0.0
    %v85 = vsel %vm30, %v74, 0.0
    %v86 = vadd.f32 %v84, %v85
    %87 = vadd.xlane.f32.xlu0 %v86
    %v88 = vpop.xlane.xlu0 %87
    %v89 = vrcp.pop 255.0
    %v90 = vmul.f32 255.0, %v89
    %v91 = vsub.f32 1.0, %v90
    %v92 = vmul.f32 %v89, %v91
    %v93 = vadd.f32 %v89, %v92
    %vm94 = vweird.f32 %v89
    %v95 = vsel %vm94, %v89, %v93
    %v96 = vmul.f32 %v83, %v95
    %v97 = vmul.f32 %v88, %v95
    %v98 = vadd.f32 %v96, 1e-06
    %v99 = vadd.f32 %v97, 1e-06
    %v100 = vrsqrt.pop %v98
    %v101 = vmul.f32 %v100, %v98
    %v102 = vmul.f32 %v101, %v100
    %v103 = vmul.f32 0.5, %v102
    %v104 = vsub.f32 1.5, %v103
    %v105 = vmul.f32 %v100, %v104
    %v106 = vmul.f32 %v98, %v105
    %vm107 = vcmp.eq.f32.partialorder %v98, inf
    %v108 = vsel %vm107, %v98, %v106
    %vm109 = vcmp.eq.f32.partialorder %v98, 0.0
    %v110 = vand.u32 %v98, 2147483648
    %v111 = vsel %vm109, %v110, %v108
    %v112 = vrsqrt.pop %v99
    %v113 = vmul.f32 %v112, %v99
    %v114 = vmul.f32 %v113, %v112
    %v115 = vmul.f32 0.5, %v114
    %v116 = vsub.f32 1.5, %v115
    %v117 = vmul.f32 %v112, %v116
    %v118 = vmul.f32 %v99, %v117
    %vm119 = vcmp.eq.f32.partialorder %v99, inf
    %v120 = vsel %vm119, %v99, %v118
    %vm121 = vcmp.eq.f32.partialorder %v99, 0.0
    %v122 = vand.u32 %v99, 2147483648
    %v123 = vsel %vm121, %v122, %v120
    %v124 = vrsqrt.pop %v98
    %v125 = vmul.f32 %v124, %v98
    %v126 = vmul.f32 %v125, %v124
    %v127 = vmul.f32 0.5, %v126
    %v128 = vsub.f32 1.5, %v127
    %v129 = vmul.f32 %v124, %v128
    %vm130 = vweird.f32 %v98
    %vm131 = vweird.f32 %v124
    %vm132 = vmor %vm130, %vm131
    %v133 = vsel %vm132, %v124, %v129
    %v134 = vrsqrt.pop %v99
    %v135 = vmul.f32 %v134, %v99
    %v136 = vmul.f32 %v135, %v134
    %v137 = vmul.f32 0.5, %v136
    %v138 = vsub.f32 1.5, %v137
    %v139 = vmul.f32 %v134, %v138
    %vm140 = vweird.f32 %v99
    %vm141 = vweird.f32 %v134
    %vm142 = vmor %vm140, %vm141
    %v143 = vsel %vm142, %v134, %v139
    %v144 = vsel %vm30, %v48, 0.0
    %v145 = vsel %vm30, %v49, 0.0
    %v146 = vadd.f32 %v144, %v145
    %v147 = vrcp.pop 2.0
    %v148 = vmul.f32 2.0, %v147
    %v149 = vsub.f32 1.0, %v148
    %v150 = vmul.f32 %v147, %v149
    %v151 = vadd.f32 %v147, %v150
    %vm152 = vweird.f32 %v147
    %v153 = vsel %vm152, %v147, %v151
    %v154 = vmul.f32 %v146, %v153
    %v155 = vsub.f32 %v48, %v154
    %v156 = vsub.f32 %v49, %v154
    %v157 = vmul.f32 %v155, %v155
    %v158 = vmul.f32 %v156, %v156
    %v159 = vsel %vm30, %v157, 0.0
    %v160 = vsel %vm30, %v158, 0.0
    %v161 = vadd.f32 %v159, %v160
    %v162 = vadd.f32 %v161, 1e-06
    %v163 = vrsqrt.pop %v162
    %v164 = vmul.f32 %v163, %v162
    %v165 = vmul.f32 %v164, %v163
    %v166 = vmul.f32 0.5, %v165
    %v167 = vsub.f32 1.5, %v166
    %v168 = vmul.f32 %v163, %v167
    %v169 = vmul.f32 %v162, %v168
    %vm170 = vcmp.eq.f32.partialorder %v162, inf
    %v171 = vsel %vm170, %v162, %v169
    %vm172 = vcmp.eq.f32.partialorder %v162, 0.0
    %v173 = vand.u32 %v162, 2147483648
    %v174 = vsel %vm172, %v173, %v171
    %v175 = vsel %vm30, %v111, 0.0
    %v176 = vsel %vm30, %v123, 0.0
    %v177 = vadd.f32 %v175, %v176
    %v178 = vmul.f32 %v177, %v153
    %v179 = vsub.f32 %v111, %v178
    %v180 = vsub.f32 %v123, %v178
    %v181 = vmul.f32 %v179, %v179
    %v182 = vmul.f32 %v180, %v180
    %v183 = vsel %vm30, %v181, 0.0
    %v184 = vsel %vm30, %v182, 0.0
    %v185 = vadd.f32 %v183, %v184
    %v186 = vadd.f32 %v185, 1e-06
    %v187 = vrsqrt.pop %v186
    %v188 = vmul.f32 %v187, %v186
    %v189 = vmul.f32 %v188, %v187
    %v190 = vmul.f32 0.5, %v189
    %v191 = vsub.f32 1.5, %v190
    %v192 = vmul.f32 %v187, %v191
    %v193 = vmul.f32 %v186, %v192
    %vm194 = vcmp.eq.f32.partialorder %v186, inf
    %v195 = vsel %vm194, %v186, %v193
    %vm196 = vcmp.eq.f32.partialorder %v186, 0.0
    %v197 = vand.u32 %v186, 2147483648
    %v198 = vsel %vm196, %v197, %v195
    %v199 = vld [vmem:[%s1] sm:$0xf]
    %v200 = vld [vmem:[%s1 + $0x4] sm:$0xf]
    %v201 = vmul.f32 %v199, %v174
    %v202 = vmul.f32 %v200, %v174
    %v203 = vadd.f32 %v48, %v201
    %v204 = vadd.f32 %v49, %v202
    %v205 = vld [vmem:[%s2] sm:$0xf]
    %v206 = vld [vmem:[%s2 + $0x4] sm:$0xf]
    %v207 = vmul.f32 %v205, %v198
    %v208 = vmul.f32 %v206, %v198
    %v209 = vadd.f32 %v111, %v207
    %v210 = vadd.f32 %v123, %v208
    %v211 = vmul.f32 %v209, %v133
    %v212 = vmul.f32 %v210, %v143
    %214 = vset.pattern.permute.xlu0 0
    %215 = vperm.xlu0 %214, %v211
    %v216 = vpop.permute.xlu0 %215
    %218 = vset.pattern.permute.xlu0 0
    %219 = vperm.xlu0 %218, %v212
    %v220 = vpop.permute.xlu0 %219
    %v222 = vunpack.c.l.s4 839922192
    %v223 = vunpack.c.0.s8 %v222
    %v224 = vperm.slane %v216, %v223
    %v226 = vunpack.c.l.s4 839922192
    %v227 = vunpack.c.0.s8 %v226
    %v228 = vperm.slane %v220, %v227
    %v231 = vmul.f32 %v62, %v224
    %v232 = vmul.f32 %v63, %v228
    %234 = vset.pattern.permute.xlu0 0
    %235 = vperm.xlu0 %234, %v203
    %v236 = vpop.permute.xlu0 %235
    %238 = vset.pattern.permute.xlu0 0
    %239 = vperm.xlu0 %238, %v204
    %v240 = vpop.permute.xlu0 %239
    %v242 = vunpack.c.l.s4 839922192
    %v243 = vunpack.c.0.s8 %v242
    %v244 = vperm.slane %v236, %v243
    %v246 = vunpack.c.l.s4 839922192
    %v247 = vunpack.c.0.s8 %v246
    %v248 = vperm.slane %v240, %v247
    %v251 = vadd.f32 %v231, %v244
    %v252 = vadd.f32 %v232, %v248
    %253 = vst [vmem:[#allocation2] sm:$0xff] %v251
    %254 = vst [vmem:[#allocation2 + $0x8] sm:$0xff] %v252
    // Predicated region
    $region14: #{tpu_custom_call.1} parent=1 // pred_check
      _
    $region15: #{tpu_custom_call.1} parent=1 // pred_check_branch
      %256 = sbr.rel (0) target = $region17
    $region16: #{tpu_custom_call.1} parent=1 // pred_region
      %258 = vsyncadd [#allocation3], 0
      %s259 = sshll.u32 [#allocation2], 4
      %s260 = int_to_ptr.vmem [resolvable:$true] %s259
      %s261 = sshll.u32 %s3, 4
      %s262 = int_to_ptr.hbm [resolvable:$true] %s261
      %267 = dma.vmem_to_hbm [thread:$0]  %s260, 256, %s262, [#allocation3], 128, 128, 8
    $region17: #{tpu_custom_call.1} parent=1 // pred_fallthru
      _
    // Predicated region
    $region18: #{tpu_custom_call.1} parent=1 // pred_check
      _
    $region19: #{tpu_custom_call.1} parent=1 // pred_check_branch
      %269 = sbr.rel (0) target = $region21
    $region20: #{tpu_custom_call.1} parent=1 // pred_region
      %271 = dma.done [#allocation3], 256
    $region21: #{tpu_custom_call.1} parent=1 // pred_fallthru
      _
    %272 = vsyncpa [#allocation3], 1

</llo_original>
